<compile_context>
chip_gen: v7x
topology: tpu7x:2x2x1
jax: 0.10.0
libtpu: 0.0.40
codegen_flags: <defaults>
</compile_context>

<pallas_src>
import functools

import jax
import jax.numpy as jnp
from jax.experimental import pallas as pl
from jax.experimental.pallas import tpu as pltpu

LANES = 128
MAX_ROW_TILE = 2048              # 2048 rows x 128 lanes x 4 B = 1 MiB / f32 block
VMEM_LIMIT_BYTES = 32 * 1024 * 1024


def _cdiv(a, b):
    return -(-a // b)


def _round_up(a, b):
    return _cdiv(a, b) * b


def _sublane_multiple(dtype):
    # Native TPU tiling: f32 -> (8,128), bf16 -> (16,128), int8/fp8 -> (32,128).
    return 8 * max(1, 4 // max(jnp.dtype(dtype).itemsize, 1))


def _num_tensorcores():
    """TensorCores a 'parallel' grid axis can shard across (1 is always safe)."""
    try:
        kind = jax.devices()[0].device_kind.lower()
    except Exception:
        return 1
    # Multi-TC / megacore chips; single-TC v5e / v6e (and unknowns) get 1.
    if any(tag in kind for tag in ("v7", "v4", "v5p")):
        return 2
    return 1


def _choose_tiling(rows, row_mult, max_row_tile=MAX_ROW_TILE, num_cores=1):
    """Return (cores, steps_per_core, row_tile).

    Guarantees every grid block contains at least one valid row (only the
    globally-last block may be partial; it is masked in-kernel).
    """
    rt1 = min(_round_up(rows, row_mult), max_row_tile)
    single = (1, _cdiv(rows, rt1), rt1)
    if num_cores <= 1:
        return single
    # Prefer >= 2 steps per core (keeps the input DMA double-buffered), then
    # fall back to >= 1 step per core, then to a single-core exact cover.
    for steps_min in (2, 1):
        blocks = _round_up(
            max(_cdiv(rows, max_row_tile), steps_min * num_cores), num_cores)
        for _ in range(16):
            rt = min(_round_up(_cdiv(rows, blocks), row_mult), max_row_tile)
            if blocks * rt >= rows and (blocks - 1) * rt < rows:
                return num_cores, blocks // num_cores, rt
            blocks += num_cores
    return single


def _mcc_sums_kernel(x_ref, y_ref, out_ref, acc_x, acc_y, acc_xy, *,
                     apply_non_lin, steps_per_core, row_tile, total_blocks,
                     rows_valid, tail_lanes, ragged):
    i = pl.program_id(1)

    @pl.when(i == 0)
    def _init():
        acc_x[...] = jnp.zeros_like(acc_x)
        acc_y[...] = jnp.zeros_like(acc_y)
        acc_xy[...] = jnp.zeros_like(acc_xy)

    x = x_ref[...].astype(jnp.float32)
    y = y_ref[...].astype(jnp.float32)
    if apply_non_lin:
        # sigmoid(x) == 0.5 * (tanh(0.5*x) + 1): one EUP op + two VALU ops.
        x = 0.5 * (jnp.tanh(0.5 * x) + 1.0)

    def _accumulate(xv, yv):
        # (row_tile, 128) -> (row_tile//8, 8, 128) follows the native (8, 128)
        # vreg tiling; summing the leading axis lowers to plain VALU vreg-adds,
        # leaving only ~3 vld + 3 vst of accumulator traffic per grid step.
        xr = xv.reshape(row_tile // 8, 8, LANES)
        yr = yv.reshape(row_tile // 8, 8, LANES)
        acc_x[...] += jnp.sum(xr, axis=0)
        acc_y[...] += jnp.sum(yr, axis=0)
        acc_xy[...] += jnp.sum(xr * yr, axis=0)

    if ragged:
        # Only the globally-last block contains padded lanes / OOB rows; every
        # other block accumulates unmasked (mask cost confined to one step).
        block = pl.program_id(0) * steps_per_core + i
        last = total_blocks - 1

        @pl.when(block != last)
        def _full():
            _accumulate(x, y)

        @pl.when(block == last)
        def _partial():
            rem_rows = rows_valid - last * row_tile        # static Python int
            row = jax.lax.broadcasted_iota(jnp.int32, x.shape, 0)
            if tail_lanes == LANES:
                valid = row < rem_rows
            else:
                lane = jax.lax.broadcasted_iota(jnp.int32, x.shape, 1)
                valid = (row < rem_rows - 1) | (
                    (row == rem_rows - 1) & (lane < tail_lanes))
            _accumulate(jnp.where(valid, x, 0.0), jnp.where(valid, y, 0.0))
    else:
        _accumulate(x, y)

    @pl.when(i == steps_per_core - 1)
    def _epilogue():
        sx = jnp.sum(acc_x[...])
        sy = jnp.sum(acc_y[...])
        sxy = jnp.sum(acc_xy[...])
        # One dense (1, 8, 128) store per core; sublanes 0/1/2 hold the sums.
        r = jax.lax.broadcasted_iota(jnp.int32, out_ref.shape, 1)
        out_ref[...] = jnp.where(
            r == 0, sx, jnp.where(r == 1, sy, jnp.where(r == 2, sxy, 0.0)))


def mcc_loss(x, y, *, epsilon=1.0, apply_non_lin=True, y_is_binary=False):
    """Forward pass of the MCC loss module. Returns a float32 scalar."""
    n = x.size
    assert y.size == n and n > 0

    xf = x.reshape(-1)
    yf = y.reshape(-1)
    if y_is_binary and jnp.dtype(yf.dtype).itemsize > 2:
        # {0, 1} targets are exact in bfloat16; halves y's HBM traffic.
        yf = yf.astype(jnp.bfloat16)

    # Pad only to the next lane multiple (<= 127 elems); padded / OOB elements
    # are excluded by the in-kernel mask on the one partial block.
    pad = (-n) % LANES
    if pad:
        xf = jnp.pad(xf, (0, pad))
        yf = jnp.pad(yf, (0, pad))
    rows = (n + pad) // LANES
    x2 = xf.reshape(rows, LANES)
    y2 = yf.reshape(rows, LANES)

    row_mult = max(_sublane_multiple(x2.dtype), _sublane_multiple(y2.dtype))
    cores, spc, row_tile = _choose_tiling(
        rows, row_mult, num_cores=_num_tensorcores())
    total_blocks = cores * spc
    covered = total_blocks * row_tile * LANES
    ragged = covered != n
    tail_lanes = n - (rows - 1) * LANES      # static, in 1..128

    in_spec = pl.BlockSpec((row_tile, LANES), lambda c, i: (c * spc + i, 0))
    out_spec = pl.BlockSpec((1, 8, LANES), lambda c, i: (c, 0, 0))

    kernel = functools.partial(
        _mcc_sums_kernel,
        apply_non_lin=apply_non_lin,
        steps_per_core=spc,
        row_tile=row_tile,
        total_blocks=total_blocks,
        rows_valid=rows,
        tail_lanes=tail_lanes,
        ragged=ragged,
    )

    in_bytes = jnp.dtype(x2.dtype).itemsize + jnp.dtype(y2.dtype).itemsize
    cost = pl.CostEstimate(
        flops=6 * n,
        transcendentals=n if apply_non_lin else 0,
        bytes_accessed=n * in_bytes + cores * 8 * LANES * 4,
    )

    sums = pl.pallas_call(
        kernel,
        out_shape=jax.ShapeDtypeStruct((cores, 8, LANES), jnp.float32),
        grid_spec=pltpu.PrefetchScalarGridSpec(
            num_scalar_prefetch=0,
            grid=(cores, spc),
            in_specs=[in_spec, in_spec],
            out_specs=out_spec,
            scratch_shapes=[
                pltpu.VMEM((8, LANES), jnp.float32),
                pltpu.VMEM((8, LANES), jnp.float32),
                pltpu.VMEM((8, LANES), jnp.float32),
            ],
        ),
        compiler_params=pltpu.CompilerParams(
            dimension_semantics=("parallel", "arbitrary"),
            vmem_limit_bytes=VMEM_LIMIT_BYTES,
        ),
        cost_estimate=cost,
    )(x2, y2)

    sum_x = jnp.sum(sums[:, 0, 0])
    sum_y = jnp.sum(sums[:, 1, 0])
    sum_xy = jnp.sum(sums[:, 2, 0])

    # tp/fp/fn/tn derived algebraically (N is static), matching the reference:
    #   tp = sum(x*y), fp = sum(x) - tp, fn = sum(y) - tp, tn = N - sum(x) - sum(y) + tp
    n_f = jnp.float32(n)
    tp = sum_xy
    fp = sum_x - sum_xy
    fn = sum_y - sum_xy
    tn = n_f - sum_x - sum_y + sum_xy
    num = tp * tn - fp * fn
    denom = jnp.sqrt((tp + fp) * (tp + fn) * (tn + fp) * (tn + fn)) + jnp.float32(
        epsilon
    )
    return jnp.float32(1.0) - num / denom


def _reference(x, y, epsilon=1.0, apply_non_lin=True):
    x = x.astype(jnp.float32)
    y = y.astype(jnp.float32)
    if apply_non_lin:
        x = jax.nn.sigmoid(x)
    tp = jnp.sum(x * y)
    fp = jnp.sum(x * (1 - y))
    fn = jnp.sum((1 - x) * y)
    tn = jnp.sum((1 - x) * (1 - y))
    num = tp * tn - fp * fn
    denom = jnp.sqrt((tp + fp) * (tp + fn) * (tn + fp) * (tn + fn)) + epsilon
    return 1.0 - num / denom


if __name__ == "__main__":
    key = jax.random.PRNGKey(0)
    kx, ky = jax.random.split(key)

    # Primary case: logits x and binary targets y, NCHW-like shape.
    x = jax.random.normal(kx, (2, 4, 16, 16), dtype=jnp.float32)
    y = (jax.random.uniform(ky, (2, 4, 16, 16)) > 0.5).astype(jnp.float32)

    out = jax.block_until_ready(mcc_loss(x, y, epsilon=1.0, apply_non_lin=True))
    ref = _reference(x, y, epsilon=1.0, apply_non_lin=True)
    assert jnp.allclose(out, ref, rtol=1e-5, atol=1e-5), (out, ref)

    # Secondary case: ragged size exercising the masked partial block.
    k2x, k2y = jax.random.split(jax.random.PRNGKey(1))
    x2 = jax.random.normal(k2x, (2, 4, 33, 16), dtype=jnp.float32)
    y2 = (jax.random.uniform(k2y, (2, 4, 33, 16)) > 0.5).astype(jnp.float32)
    out2 = jax.block_until_ready(mcc_loss(x2, y2, epsilon=1.0, apply_non_lin=True))
    ref2 = _reference(x2, y2, epsilon=1.0, apply_non_lin=True)
    assert jnp.allclose(out2, ref2, rtol=1e-5, atol=1e-5), (out2, ref2)

    # Third case: bf16 fast path for binary targets (exact for {0,1}).
    out3 = jax.block_until_ready(
        mcc_loss(x, y, epsilon=1.0, apply_non_lin=True, y_is_binary=True))
    assert jnp.allclose(out3, ref, rtol=1e-5, atol=1e-5), (out3, ref)

    print("KERNEL_OK")
</pallas_src>

<mosaic_0001>
module attributes {stable_mosaic.version = 11 : i64} {
  func.func @_mcc_sums_kernel(%arg0: i32, %arg1: i32, %arg2: memref<16x128xf32, #tpu.memory_space<vmem>>, %arg3: memref<16x128xf32, #tpu.memory_space<vmem>>, %arg4: memref<1x8x128xf32, #tpu.memory_space<vmem>>, %arg5: memref<8x128xf32, #tpu.memory_space<vmem>>, %arg6: memref<8x128xf32, #tpu.memory_space<vmem>>, %arg7: memref<8x128xf32, #tpu.memory_space<vmem>>) attributes {dimension_semantics = [#tpu.dimension_semantics<parallel>, #tpu.dimension_semantics<arbitrary>], iteration_bounds = array<i64: 1, 1>, scalar_prefetch = 0 : i64, scratch_operands = 3 : i64, tpu.core_type = #tpu.core_type<tc>, window_params = [{transform_indices = @transform_0, window_bounds = array<i64: 16, 128>}, {transform_indices = @transform_1, window_bounds = array<i64: 16, 128>}, {transform_indices = @transform_2, window_bounds = array<i64: 1, 8, 128>}]} {
    %c0_i32 = arith.constant 0 : i32
    %0 = arith.cmpi eq, %arg1, %c0_i32 : i32
    %1 = arith.extui %0 : i1 to i32
    %c0_i32_0 = arith.constant 0 : i32
    %2 = arith.cmpi ne, %1, %c0_i32_0 : i32
    scf.if %2 {
      %cst_23 = arith.constant 0.000000e+00 : f32
      %30 = vector.broadcast %cst_23 : f32 to vector<8x128xf32>
      %c0_24 = arith.constant 0 : index
      %c0_25 = arith.constant 0 : index
      %31 = vector.load %arg5[%c0_24, %c0_25] : memref<8x128xf32, #tpu.memory_space<vmem>>, vector<8x128xf32>
      tpu.vector_store %arg5[%c0_24, %c0_25], %30 {strides = array<i32>} : memref<8x128xf32, #tpu.memory_space<vmem>>, vector<8x128xf32>,
      %cst_26 = arith.constant 0.000000e+00 : f32
      %32 = vector.broadcast %cst_26 : f32 to vector<8x128xf32>
      %c0_27 = arith.constant 0 : index
      %c0_28 = arith.constant 0 : index
      %33 = vector.load %arg6[%c0_27, %c0_28] : memref<8x128xf32, #tpu.memory_space<vmem>>, vector<8x128xf32>
      tpu.vector_store %arg6[%c0_27, %c0_28], %32 {strides = array<i32>} : memref<8x128xf32, #tpu.memory_space<vmem>>, vector<8x128xf32>,
      %cst_29 = arith.constant 0.000000e+00 : f32
      %34 = vector.broadcast %cst_29 : f32 to vector<8x128xf32>
      %c0_30 = arith.constant 0 : index
      %c0_31 = arith.constant 0 : index
      %35 = vector.load %arg7[%c0_30, %c0_31] : memref<8x128xf32, #tpu.memory_space<vmem>>, vector<8x128xf32>
      tpu.vector_store %arg7[%c0_30, %c0_31], %34 {strides = array<i32>} : memref<8x128xf32, #tpu.memory_space<vmem>>, vector<8x128xf32>,
    } else {
    }
    %c0 = arith.constant 0 : index
    %c0_1 = arith.constant 0 : index
    %3 = vector.load %arg2[%c0, %c0_1] : memref<16x128xf32, #tpu.memory_space<vmem>>, vector<16x128xf32>
    %c0_2 = arith.constant 0 : index
    %c0_3 = arith.constant 0 : index
    %4 = vector.load %arg3[%c0_2, %c0_3] : memref<16x128xf32, #tpu.memory_space<vmem>>, vector<16x128xf32>
    %cst = arith.constant 5.000000e-01 : f32
    %5 = vector.broadcast %cst : f32 to vector<16x128xf32>
    %6 = arith.mulf %5, %3 : vector<16x128xf32>
    %7 = math.tanh %6 : vector<16x128xf32>
    %cst_4 = arith.constant 1.000000e+00 : f32
    %8 = vector.broadcast %cst_4 : f32 to vector<16x128xf32>
    %9 = arith.addf %7, %8 : vector<16x128xf32>
    %cst_5 = arith.constant 5.000000e-01 : f32
    %10 = vector.broadcast %cst_5 : f32 to vector<16x128xf32>
    %11 = arith.mulf %10, %9 : vector<16x128xf32>
    %12 = vector.shape_cast %11 : vector<16x128xf32> to vector<2x8x128xf32>
    %13 = vector.shape_cast %4 : vector<16x128xf32> to vector<2x8x128xf32>
    %c0_6 = arith.constant 0 : index
    %c0_7 = arith.constant 0 : index
    %14 = vector.load %arg5[%c0_6, %c0_7] : memref<8x128xf32, #tpu.memory_space<vmem>>, vector<8x128xf32>
    %cst_8 = arith.constant dense<0.000000e+00> : vector<8x128xf32>
    %15 = vector.multi_reduction <add>, %12, %cst_8 [0] : vector<2x8x128xf32> to vector<8x128xf32>
    %16 = arith.addf %14, %15 : vector<8x128xf32>
    %c0_9 = arith.constant 0 : index
    %c0_10 = arith.constant 0 : index
    %17 = vector.load %arg5[%c0_9, %c0_10] : memref<8x128xf32, #tpu.memory_space<vmem>>, vector<8x128xf32>
    tpu.vector_store %arg5[%c0_9, %c0_10], %16 {strides = array<i32>} : memref<8x128xf32, #tpu.memory_space<vmem>>, vector<8x128xf32>,
    %c0_11 = arith.constant 0 : index
    %c0_12 = arith.constant 0 : index
    %18 = vector.load %arg6[%c0_11, %c0_12] : memref<8x128xf32, #tpu.memory_space<vmem>>, vector<8x128xf32>
    %cst_13 = arith.constant dense<0.000000e+00> : vector<8x128xf32>
    %19 = vector.multi_reduction <add>, %13, %cst_13 [0] : vector<2x8x128xf32> to vector<8x128xf32>
    %20 = arith.addf %18, %19 : vector<8x128xf32>
    %c0_14 = arith.constant 0 : index
    %c0_15 = arith.constant 0 : index
    %21 = vector.load %arg6[%c0_14, %c0_15] : memref<8x128xf32, #tpu.memory_space<vmem>>, vector<8x128xf32>
    tpu.vector_store %arg6[%c0_14, %c0_15], %20 {strides = array<i32>} : memref<8x128xf32, #tpu.memory_space<vmem>>, vector<8x128xf32>,
    %c0_16 = arith.constant 0 : index
    %c0_17 = arith.constant 0 : index
    %22 = vector.load %arg7[%c0_16, %c0_17] : memref<8x128xf32, #tpu.memory_space<vmem>>, vector<8x128xf32>
    %23 = arith.mulf %12, %13 : vector<2x8x128xf32>
    %cst_18 = arith.constant dense<0.000000e+00> : vector<8x128xf32>
    %24 = vector.multi_reduction <add>, %23, %cst_18 [0] : vector<2x8x128xf32> to vector<8x128xf32>
    %25 = arith.addf %22, %24 : vector<8x128xf32>
    %c0_19 = arith.constant 0 : index
    %c0_20 = arith.constant 0 : index
    %26 = vector.load %arg7[%c0_19, %c0_20] : memref<8x128xf32, #tpu.memory_space<vmem>>, vector<8x128xf32>
    tpu.vector_store %arg7[%c0_19, %c0_20], %25 {strides = array<i32>} : memref<8x128xf32, #tpu.memory_space<vmem>>, vector<8x128xf32>,
    %c0_i32_21 = arith.constant 0 : i32
    %27 = arith.cmpi eq, %arg1, %c0_i32_21 : i32
    %28 = arith.extui %27 : i1 to i32
    %c0_i32_22 = arith.constant 0 : i32
    %29 = arith.cmpi ne, %28, %c0_i32_22 : i32
    scf.if %29 {
      %c0_23 = arith.constant 0 : index
      %c0_24 = arith.constant 0 : index
      %30 = vector.load %arg5[%c0_23, %c0_24] : memref<8x128xf32, #tpu.memory_space<vmem>>, vector<8x128xf32>
      %31 = vector.shape_cast %30 : vector<8x128xf32> to vector<1x8x128xf32>
      %cst_25 = arith.constant dense<0.000000e+00> : vector<1xf32>
      %32 = vector.multi_reduction <add>, %31, %cst_25 [1, 2] : vector<1x8x128xf32> to vector<1xf32>
      %33 = vector.shape_cast %32 : vector<1xf32> to vector<1x1x1xf32>
      %34 = vector.extract %33[0, 0, 0] : f32 from vector<1x1x1xf32>
      %c0_26 = arith.constant 0 : index
      %c0_27 = arith.constant 0 : index
      %35 = vector.load %arg6[%c0_26, %c0_27] : memref<8x128xf32, #tpu.memory_space<vmem>>, vector<8x128xf32>
      %36 = vector.shape_cast %35 : vector<8x128xf32> to vector<1x8x128xf32>
      %cst_28 = arith.constant dense<0.000000e+00> : vector<1xf32>
      %37 = vector.multi_reduction <add>, %36, %cst_28 [1, 2] : vector<1x8x128xf32> to vector<1xf32>
      %38 = vector.shape_cast %37 : vector<1xf32> to vector<1x1x1xf32>
      %39 = vector.extract %38[0, 0, 0] : f32 from vector<1x1x1xf32>
      %c0_29 = arith.constant 0 : index
      %c0_30 = arith.constant 0 : index
      %40 = vector.load %arg7[%c0_29, %c0_30] : memref<8x128xf32, #tpu.memory_space<vmem>>, vector<8x128xf32>
      %41 = vector.shape_cast %40 : vector<8x128xf32> to vector<1x8x128xf32>
      %cst_31 = arith.constant dense<0.000000e+00> : vector<1xf32>
      %42 = vector.multi_reduction <add>, %41, %cst_31 [1, 2] : vector<1x8x128xf32> to vector<1xf32>
      %43 = vector.shape_cast %42 : vector<1xf32> to vector<1x1x1xf32>
      %44 = vector.extract %43[0, 0, 0] : f32 from vector<1x1x1xf32>
      %45 = tpu.iota {dimensions = array<i32: 1>} : vector<1x8x128xi32>
      %c0_i32_32 = arith.constant 0 : i32
      %46 = vector.broadcast %c0_i32_32 : i32 to vector<1x8x128xi32>
      %47 = arith.cmpi eq, %45, %46 : vector<1x8x128xi32>
      %c1_i32 = arith.constant 1 : i32
      %48 = vector.broadcast %c1_i32 : i32 to vector<1x8x128xi32>
      %49 = arith.cmpi eq, %45, %48 : vector<1x8x128xi32>
      %c2_i32 = arith.constant 2 : i32
      %50 = vector.broadcast %c2_i32 : i32 to vector<1x8x128xi32>
      %51 = arith.cmpi eq, %45, %50 : vector<1x8x128xi32>
      %cst_33 = arith.constant 0.000000e+00 : f32
      %52 = vector.broadcast %44 : f32 to vector<1x8x128xf32>
      %53 = vector.broadcast %cst_33 : f32 to vector<1x8x128xf32>
      %54 = arith.select %51, %52, %53 : vector<1x8x128xi1>, vector<1x8x128xf32>
      %55 = vector.broadcast %39 : f32 to vector<1x8x128xf32>
      %56 = arith.select %49, %55, %54 : vector<1x8x128xi1>, vector<1x8x128xf32>
      %57 = vector.broadcast %34 : f32 to vector<1x8x128xf32>
      %58 = arith.select %47, %57, %56 : vector<1x8x128xi1>, vector<1x8x128xf32>
      %c0_34 = arith.constant 0 : index
      %c0_35 = arith.constant 0 : index
      %c0_36 = arith.constant 0 : index
      %59 = vector.load %arg4[%c0_34, %c0_35, %c0_36] : memref<1x8x128xf32, #tpu.memory_space<vmem>>, vector<1x8x128xf32>
      tpu.vector_store %arg4[%c0_34, %c0_35, %c0_36], %58 {strides = array<i32>} : memref<1x8x128xf32, #tpu.memory_space<vmem>>, vector<1x8x128xf32>,
    } else {
    }
    return
  }
  func.func @transform_0(%arg0: i32, %arg1: i32) -> (i32, i32) {
    %c1_i32 = arith.constant 1 : i32
    %0 = arith.muli %arg0, %c1_i32 : i32
    %1 = arith.addi %0, %arg1 : i32
    %c0_i32 = arith.constant 0 : i32
    %c0_i32_0 = arith.constant 0 : i32
    return %1, %c0_i32 : i32, i32
  }
  func.func @transform_1(%arg0: i32, %arg1: i32) -> (i32, i32) {
    %c1_i32 = arith.constant 1 : i32
    %0 = arith.muli %arg0, %c1_i32 : i32
    %1 = arith.addi %0, %arg1 : i32
    %c0_i32 = arith.constant 0 : i32
    %c0_i32_0 = arith.constant 0 : i32
    return %1, %c0_i32 : i32, i32
  }
  func.func @transform_2(%arg0: i32, %arg1: i32) -> (i32, i32, i32) {
    %c0_i32 = arith.constant 0 : i32
    %c0_i32_0 = arith.constant 0 : i32
    %c0_i32_1 = arith.constant 0 : i32
    return %arg0, %c0_i32, %c0_i32_0 : i32, i32, i32
  }
}

</mosaic_0001>

<llo_original>
// kernel: tpu_custom_call.1
$region0: #{tpu_custom_call.1}
  #allocation0 [shape = 'u32[]', space=smem, size = 0x4, offset = 0x4, fixed_abs, tag = 'smem constant byte address 0x4 - core index']
  #allocation1 [shape = 'u32[144,128]{1,0:T(1,128)}', space=vmem, size = 0x12000, scoped, tag = 'internal scratch']
  #allocation2 [shape = 'f32[8,128]{1,0:T(8,128)}', space=vmem, size = 0x1000, scoped, tag = 'scratch operand']
  #allocation3 [shape = 'f32[8,128]{1,0:T(8,128)}', space=vmem, size = 0x1000, scoped, tag = 'scratch operand']
  #allocation4 [shape = 'f32[8,128]{1,0:T(8,128)}', space=vmem, size = 0x1000, scoped, tag = 'scratch operand']
  %s0 = inlined_call_operand.hbm [shape: f32[16,128], index: 0, kind: input, shape index: {}]
  %s1 = inlined_call_operand.hbm [shape: f32[16,128], index: 1, kind: input, shape index: {}]
  %s2 = inlined_call_operand.hbm [shape: f32[1,8,128], index: 2, kind: output, shape index: {}]
  %s3 = sld [smem:[#allocation0]]
  $region34: #{tpu_custom_call.1} parent=0
    _
  %s5 = ssub.s32 1, %s3
  %s6 = scalar_select 0, %s5, %s3
  $region1: #{tpu_custom_call.1} parent=0
    #allocation5 [shape = 'u8[8192]{0}', space=vmem, size = 0x2000, scoped, tag = 'input window, operand 0, single buffered']
    #allocation6 [shape = 's32[1]{0}', space=sflag, size = 0x4, scoped, tag = 'scoped memory for tpu_custom_call.1']
    #allocation7 [shape = 's32[1]{0}', space=sflag, size = 0x4, scoped, tag = 'scoped memory for tpu_custom_call.1']
    #allocation8 [shape = 'u8[8192]{0}', space=vmem, size = 0x2000, scoped, tag = 'input window, operand 1, single buffered']
    #allocation9 [shape = 's32[1]{0}', space=sflag, size = 0x4, scoped, tag = 'scoped memory for tpu_custom_call.1']
    #allocation10 [shape = 'u8[4096]{0}', space=vmem, size = 0x1000, scoped, tag = 'output window, operand 0, single buffered']
    %7 = vsyncpa [#allocation6], 0
    %8 = vsyncpa [#allocation9], 0
    %9 = vsyncpa [#allocation7], 0
    // Predicated region
    $region2: #{tpu_custom_call.1} parent=1 // pred_check
      _
    $region3: #{tpu_custom_call.1} parent=1 // pred_check_branch
      %11 = sbr.rel (0) target = $region5
    $region4: #{tpu_custom_call.1} parent=1 // pred_region
      %s12 = sadd.s32 0, 0
      %s13 = smul.u32 2, %s12
      %s15 = ssub.s32 256, 256
      %16 = vsyncadd [#allocation6], %s15
      %s17 = smul.addr %s13, 128
      %s18 = scalar_lea.hbm %s0, %s17
      %s19 = sshll.u32 [#allocation5], 4
      %s20 = int_to_ptr.vmem [resolvable:$true] %s19
      %25 = dma.hbm_to_vmem [thread:$0]  %s18, 256, %s20, [#allocation6], 128, 128, 8
    $region5: #{tpu_custom_call.1} parent=1 // pred_fallthru
      _
    // Predicated region
    $region6: #{tpu_custom_call.1} parent=1 // pred_check
      _
    $region7: #{tpu_custom_call.1} parent=1 // pred_check_branch
      %27 = sbr.rel (0) target = $region9
    $region8: #{tpu_custom_call.1} parent=1 // pred_region
      %s28 = sadd.s32 0, 0
      %s29 = smul.u32 2, %s28
      %s31 = ssub.s32 256, 256
      %32 = vsyncadd [#allocation9], %s31
      %s33 = smul.addr %s29, 128
      %s34 = scalar_lea.hbm %s1, %s33
      %s35 = sshll.u32 [#allocation8], 4
      %s36 = int_to_ptr.vmem [resolvable:$true] %s35
      %41 = dma.hbm_to_vmem [thread:$0]  %s34, 256, %s36, [#allocation9], 128, 128, 8
    $region9: #{tpu_custom_call.1} parent=1 // pred_fallthru
      _
    // Predicated region
    $region10: #{tpu_custom_call.1} parent=1 // pred_check
      _
    $region11: #{tpu_custom_call.1} parent=1 // pred_check_branch
      %43 = sbr.rel (0) target = $region13
    $region12: #{tpu_custom_call.1} parent=1 // pred_region
      %44 = dma.done [#allocation6], 256
    $region13: #{tpu_custom_call.1} parent=1 // pred_fallthru
      _
    // Predicated region
    $region14: #{tpu_custom_call.1} parent=1 // pred_check
      _
    $region15: #{tpu_custom_call.1} parent=1 // pred_check_branch
      %46 = sbr.rel (0) target = $region17
    $region16: #{tpu_custom_call.1} parent=1 // pred_region
      %47 = dma.done [#allocation9], 256
    $region17: #{tpu_custom_call.1} parent=1 // pred_fallthru
      _
    %s48 = sadd.s32 0, 0
    %s49 = smul.u32 2, %s48
    %s50 = sadd.s32 0, 0
    %s51 = smul.u32 2, %s50
    %p52 = scmp.eq.s32.totalorder 0, 0
    // Predicated region
    $region18: #{tpu_custom_call.1} parent=1 // pred_check
      %p53 = pneg %p52
    $region19: #{tpu_custom_call.1} parent=1 // pred_check_branch
      %55 = sbr.rel (%p53) target = $region21
    $region20: #{tpu_custom_call.1} parent=1 // pred_region
      %56 = vst [vmem:[#allocation2] sm:$0xff] 0.0
      %57 = vst [vmem:[#allocation3] sm:$0xff] 0.0
      %58 = vst [vmem:[#allocation4] sm:$0xff] 0.0
    $region21: #{tpu_custom_call.1} parent=1 // pred_fallthru
      _
    %v59 = vld [vmem:[#allocation5] sm:$0xff]
    %v60 = vld [vmem:[#allocation5 + $0x8] sm:$0xff]
    %v61 = vld [vmem:[#allocation8] sm:$0xff]
    %v62 = vld [vmem:[#allocation8 + $0x8] sm:$0xff]
    %v63 = vmul.f32 %v59, 0.5
    %v64 = vmul.f32 %v60, 0.5
    %v65 = vtanh.pop %v63
    %v66 = vtanh.pop %v64
    %v67 = vadd.f32 %v65, 1.0
    %v68 = vadd.f32 %v66, 1.0
    %v69 = vmul.f32 %v67, 0.5
    %v70 = vmul.f32 %v68, 0.5
    %v71 = vld [vmem:[#allocation2] sm:$0xff]
    %v72 = vadd.f32 %v69, %v70
    %v73 = vadd.f32 %v71, %v72
    %74 = vst [vmem:[#allocation2] sm:$0xff] %v73
    %v75 = vld [vmem:[#allocation3] sm:$0xff]
    %v76 = vadd.f32 %v61, %v62
    %v77 = vadd.f32 %v75, %v76
    %78 = vst [vmem:[#allocation3] sm:$0xff] %v77
    %v79 = vld [vmem:[#allocation4] sm:$0xff]
    %v80 = vmul.f32 %v69, %v61
    %v81 = vmul.f32 %v70, %v62
    %v82 = vadd.f32 %v80, %v81
    %v83 = vadd.f32 %v79, %v82
    %84 = vst [vmem:[#allocation4] sm:$0xff] %v83
    // Predicated region
    $region22: #{tpu_custom_call.1} parent=1 // pred_check
      %p85 = pneg %p52
    $region23: #{tpu_custom_call.1} parent=1 // pred_check_branch
      %87 = sbr.rel (%p85) target = $region25
    $region24: #{tpu_custom_call.1} parent=1 // pred_region
      %v88 = vld [vmem:[#allocation2] sm:$0xff]
      %89 = vadd.xlane.f32.xlu0 %v88
      %v90 = vpop.xlane.xlu0 %89
      %v91 = vrot.slane %v90, 4
      %v92 = vadd.f32 %v90, %v91
      %v93 = vrot.slane %v92, 2
      %v94 = vadd.f32 %v92, %v93
      %v95 = vrot.slane %v94, 1
      %v96 = vadd.f32 %v94, %v95
      %s97 = vtos %v96
      %v98 = vld [vmem:[#allocation3] sm:$0xff]
      %99 = vadd.xlane.f32.xlu0 %v98
      %v100 = vpop.xlane.xlu0 %99
      %v101 = vrot.slane %v100, 4
      %v102 = vadd.f32 %v100, %v101
      %v103 = vrot.slane %v102, 2
      %v104 = vadd.f32 %v102, %v103
      %v105 = vrot.slane %v104, 1
      %v106 = vadd.f32 %v104, %v105
      %s107 = vtos %v106
      %v108 = vld [vmem:[#allocation4] sm:$0xff]
      %109 = vadd.xlane.f32.xlu0 %v108
      %v110 = vpop.xlane.xlu0 %109
      %v111 = vrot.slane %v110, 4
      %v112 = vadd.f32 %v110, %v111
      %v113 = vrot.slane %v112, 2
      %v114 = vadd.f32 %v112, %v113
      %v115 = vrot.slane %v114, 1
      %v116 = vadd.f32 %v114, %v115
      %s117 = vtos %v116
      %v118 = vlaneseq
      %v119 = vshrl.u32 %v118, 7
      %vm120 = vcmp.eq.s32.totalorder %v119, 0
      %vm121 = vcmp.eq.s32.totalorder %v119, 1
      %vm122 = vcmp.eq.s32.totalorder %v119, 2
      %v123 = vstv %s117
      %v124 = vsel %vm122, %v123, 0.0
      %v125 = vstv %s107
      %v126 = vsel %vm121, %v125, %v124
      %v127 = vstv %s97
      %v128 = vsel %vm120, %v127, %v126
      %129 = vst [vmem:[#allocation10] sm:$0xff] %v128
    $region25: #{tpu_custom_call.1} parent=1 // pred_fallthru
      _
    // Predicated region
    $region26: #{tpu_custom_call.1} parent=1 // pred_check
      _
    $region27: #{tpu_custom_call.1} parent=1 // pred_check_branch
      %131 = sbr.rel (0) target = $region29
    $region28: #{tpu_custom_call.1} parent=1 // pred_region
      %s133 = ssub.s32 128, 128
      %134 = vsyncadd [#allocation7], %s133
      %s136 = sshll.u32 [#allocation10], 4
      %s137 = int_to_ptr.vmem [resolvable:$true] %s136
      %139 = dma.vmem_to_hbm [thread:$0]  %s137, 128, %s2, [#allocation7]
    $region29: #{tpu_custom_call.1} parent=1 // pred_fallthru
      _
    // Predicated region
    $region30: #{tpu_custom_call.1} parent=1 // pred_check
      _
    $region31: #{tpu_custom_call.1} parent=1 // pred_check_branch
      %141 = sbr.rel (0) target = $region33
    $region32: #{tpu_custom_call.1} parent=1 // pred_region
      %142 = dma.done [#allocation7], 128
    $region33: #{tpu_custom_call.1} parent=1 // pred_fallthru
      _
    %143 = vsyncpa [#allocation6], 1
    %144 = vsyncpa [#allocation9], 1
    %145 = vsyncpa [#allocation7], 1

</llo_original>
